<compile_context>
chip_gen: v7x
topology: tpu7x:2x2x1
jax: 0.10.0
libtpu: 0.0.40
codegen_flags: <defaults>
</compile_context>

<pallas_src>
import functools
import numpy as np
import jax
import jax.numpy as jnp
from jax.experimental import pallas as pl
from jax.experimental.pallas import tpu as pltpu


# ----------------------------------------------------------------------------
# Pallas kernels
# ----------------------------------------------------------------------------

def _stacked_linear_kernel(x_ref, w_ref, b_ref, o_ref, *, activation):
    """One node type per grid step: o[t] = act(x[t] @ w[t] + b[t])."""
    y = jnp.dot(x_ref[0], w_ref[0], preferred_element_type=jnp.float32) + b_ref[0]
    if activation == "relu":
        y = jnp.maximum(y, 0.0)
    o_ref[0] = y.astype(o_ref.dtype)


def stacked_linear(x, w, b, activation="none"):
    """x:(T,N,F)  w:(T,F,C)  b:(T,1,C)  ->  (T,N,C).  Grid over node types."""
    t, n, f = x.shape
    c = w.shape[2]
    return pl.pallas_call(
        functools.partial(_stacked_linear_kernel, activation=activation),
        grid=(t,),
        out_shape=jax.ShapeDtypeStruct((t, n, c), jnp.float32),
        in_specs=[
            pl.BlockSpec((1, n, f), lambda i: (i, 0, 0)),
            pl.BlockSpec((1, f, c), lambda i: (i, 0, 0)),
            pl.BlockSpec((1, 1, c), lambda i: (i, 0, 0)),
        ],
        out_specs=pl.BlockSpec((1, n, c), lambda i: (i, 0, 0)),
        compiler_params=pltpu.CompilerParams(
            dimension_semantics=("parallel",)),
    )(x, w, b)


def _gelu_erf(x):
    """Exact-erf GELU; erf via Abramowitz-Stegun 7.1.26 (|err| < 1.5e-7).

    Built only from exp / mul / div / where, so it lowers on Mosaic."""
    g = x * jnp.float32(0.7071067811865476)
    ag = jnp.abs(g)
    t = 1.0 / (1.0 + jnp.float32(0.3275911) * ag)
    poly = ((((jnp.float32(1.061405429) * t - jnp.float32(1.453152027)) * t
              + jnp.float32(1.421413741)) * t - jnp.float32(0.284496736)) * t
            + jnp.float32(0.254829592)) * t
    erf_abs = 1.0 - poly * jnp.exp(-ag * ag)
    erf = jnp.where(g >= 0.0, erf_abs, -erf_abs)
    return 0.5 * x * (1.0 + erf)


def _hgt_layer_kernel(meta_ref, alpha_ref, h_all_ref,
                      qw_ref, qb_ref, ow_ref, ob_ref,
                      kw_ref, kb_ref, vw_ref, vb_ref, bias_ref,
                      o_ref, *, heads, dhead, n_rel):
    """Fused HGTConv update; one destination node type per grid step.

    meta_ref  (T, 1+R) int32 SMEM : [is_dst, src_type(slot 0), ..., src_type(slot R-1)]
    alpha_ref (T, 1)   f32  SMEM  : sigmoid(skip) gate per node type
    h_all_ref (T, n_pad, hidden)  : previous features of ALL node types (resident)
    qw/qb     (1, hidden, hidden) / (1, 1, hidden)  : Q projection of the dst type
    ow/ob     (1, hidden, hidden) / (1, 1, hidden)  : out Linear of the dst type
    kw/kb/vw/vb (1, R, hidden, hidden) / (1, R, 1, hidden)
              : K/V projections PRE-COMPOSED with the block-diag relation matrices
                (p_rel / sqrt(d) folded into K); zero for padded relation slots.
    bias_ref  (1, R, n_pad, n_pad): additive mask bias (0 edge, -1e30 otherwise)
    o_ref     (1, n_pad, hidden)  : next-layer feature slab of the dst type
    """
    t = pl.program_id(0)

    @pl.when(meta_ref[t, 0] == 0)
    def _passthrough():
        # PyG returns None for node types that are never a destination; we carry the
        # previous features forward so later layers stay defined (documented deviation).
        o_ref[0] = h_all_ref[t]

    @pl.when(meta_ref[t, 0] != 0)
    def _update():
        h_dst = h_all_ref[t]                                       # (Nd, hidden)
        nd = h_dst.shape[0]
        q = jnp.dot(h_dst, qw_ref[0],
                    preferred_element_type=jnp.float32) + qb_ref[0]

        # Relation-transformed K/V per incoming edge-type slot (single matmuls: the
        # block-diag relation matrices were folded into kw/vw at prep time).
        ks, vs = [], []
        for r in range(n_rel):
            src = meta_ref[t, 1 + r]
            h_src = h_all_ref[src]                                 # (M, hidden)
            ks.append(jnp.dot(h_src, kw_ref[0, r],
                              preferred_element_type=jnp.float32) + kb_ref[0, r])
            vs.append(jnp.dot(h_src, vw_ref[0, r],
                              preferred_element_type=jnp.float32) + vb_ref[0, r])

        msg_parts = []
        for h in range(heads):                                     # heads is tiny: unrolled
            sl = slice(h * dhead, (h + 1) * dhead)
            qh = q[:, sl]
            # Additive-bias masked scores per edge-type block (one VPU add, no select).
            s_blocks = []
            for r in range(n_rel):
                s = jax.lax.dot_general(qh, ks[r][:, sl], (((1,), (1,)), ((), ())),
                                        preferred_element_type=jnp.float32)
                s_blocks.append(s + bias_ref[0, r])
            smax = s_blocks[0].max(axis=-1, keepdims=True)
            for r in range(1, n_rel):
                smax = jnp.maximum(smax, s_blocks[r].max(axis=-1, keepdims=True))
            smax = jnp.where(smax < jnp.float32(-1e29), 0.0, smax)  # isolated / padded rows
            # Unnormalized accumulation; exp(bias - smax) underflows to exactly 0 in f32
            # for masked entries, so no p * mask multiply is needed.
            denom = jnp.zeros((nd, 1), jnp.float32)
            msg_h = jnp.zeros((nd, dhead), jnp.float32)
            for r in range(n_rel):
                p = jnp.exp(s_blocks[r] - smax)
                denom = denom + jnp.sum(p, axis=-1, keepdims=True)
                msg_h = msg_h + jnp.dot(p, vs[r][:, sl],
                                        preferred_element_type=jnp.float32)
            inv = pl.reciprocal(jnp.where(denom > 0.0, denom, 1.0), approx=True)
            msg_parts.append(msg_h * inv)

        # Full-width GELU + out Linear (single MXU push) after the head loop.
        msg = jnp.concatenate(msg_parts, axis=-1)                  # (Nd, hidden)
        a_out = jnp.dot(_gelu_erf(msg), ow_ref[0],
                        preferred_element_type=jnp.float32) + ob_ref[0]
        alpha = alpha_ref[t, 0]
        o_ref[0] = (alpha * a_out + (1.0 - alpha) * h_dst).astype(o_ref.dtype)


def hgt_layer_apply(h_st, pack, meta, bias, *, hidden, heads, n_rel):
    """One fused HGTConv layer: grid over node (destination) types, output IS the next
    h_st (T, n_pad, hidden) -- no wrapper re-stacking."""
    T, n_pad, _ = h_st.shape
    per_t3 = lambda i: (i, 0, 0)
    per_t4 = lambda i: (i, 0, 0, 0)
    const3 = lambda i: (0, 0, 0)
    return pl.pallas_call(
        functools.partial(_hgt_layer_kernel, heads=heads, dhead=hidden // heads,
                          n_rel=n_rel),
        grid=(T,),
        out_shape=jax.ShapeDtypeStruct((T, n_pad, hidden), jnp.float32),
        in_specs=[
            pl.BlockSpec(memory_space=pltpu.MemorySpace.SMEM),          # meta  (T, 1+R)
            pl.BlockSpec(memory_space=pltpu.MemorySpace.SMEM),          # alpha (T, 1)
            pl.BlockSpec((T, n_pad, hidden), const3),                   # h_all (resident)
            pl.BlockSpec((1, hidden, hidden), per_t3),                  # q_w
            pl.BlockSpec((1, 1, hidden), per_t3),                       # q_b
            pl.BlockSpec((1, hidden, hidden), per_t3),                  # out_w
            pl.BlockSpec((1, 1, hidden), per_t3),                       # out_b
            pl.BlockSpec((1, n_rel, hidden, hidden), per_t4),           # k_w  (composed)
            pl.BlockSpec((1, n_rel, 1, hidden), per_t4),                # k_b  (composed)
            pl.BlockSpec((1, n_rel, hidden, hidden), per_t4),           # v_w  (composed)
            pl.BlockSpec((1, n_rel, 1, hidden), per_t4),                # v_b  (composed)
            pl.BlockSpec((1, n_rel, n_pad, n_pad), per_t4),             # mask bias
        ],
        out_specs=pl.BlockSpec((1, n_pad, hidden), per_t3),
        compiler_params=pltpu.CompilerParams(
            dimension_semantics=("parallel",)),                         # v7x: 2 TCs
    )(meta, pack["alpha"], h_st, pack["qw"], pack["qb"], pack["ow"], pack["ob"],
      pack["kw"], pack["kb"], pack["vw"], pack["vb"], bias)


def _out_linear_kernel(x_ref, w_ref, b_ref, o_ref):
    y = jnp.dot(x_ref[0], w_ref[...], preferred_element_type=jnp.float32) + b_ref[...]
    o_ref[0] = y.astype(o_ref.dtype)


def pallas_out_linear(h_st, w, b, t_target):
    """Final classifier on the target node type; lane-dense (128-wide) padded store.
    TODO(synk): could be fused into the last layer's kernel for the target dst type."""
    T, n_pad, hidden = h_st.shape
    c = w.shape[1]
    c_pad = -(-c // 128) * 128
    w_p = jnp.pad(w, ((0, 0), (0, c_pad - c)))
    b_p = jnp.pad(b, (0, c_pad - c)).reshape(1, -1)
    out = pl.pallas_call(
        _out_linear_kernel,
        grid=(1,),
        out_shape=jax.ShapeDtypeStruct((1, n_pad, c_pad), jnp.float32),
        in_specs=[
            pl.BlockSpec((1, n_pad, hidden), lambda i: (t_target, 0, 0)),
            pl.BlockSpec((hidden, c_pad), lambda i: (0, 0)),
            pl.BlockSpec((1, c_pad), lambda i: (0, 0)),
        ],
        out_specs=pl.BlockSpec((1, n_pad, c_pad), lambda i: (0, 0, 0)),
    )(h_st, w_p, b_p)
    return out[0, :, :c]


# ----------------------------------------------------------------------------
# Model: parameter init + one-time prep + forward pass
# ----------------------------------------------------------------------------

def init_params(key, node_types, feat_dims, edge_types, hidden, heads,
                out_channels, num_layers):
    d = hidden // heads
    keys = iter(jax.random.split(key, 4096))

    def nrm(shape, scale=0.2):
        return scale * jax.random.normal(next(keys), shape, dtype=jnp.float32)

    params = {
        "lin_in": {nt: {"w": nrm((feat_dims[nt], hidden)), "b": nrm((hidden,))}
                   for nt in node_types},
        "convs": [],
        "out_lin": {},
    }
    for _ in range(num_layers):
        layer = {
            # fused kqv projection (PyG splits the output as k, q, v along dim 1)
            "kqv": {nt: {"w": nrm((hidden, 3 * hidden)), "b": nrm((3 * hidden,))}
                    for nt in node_types},
            "out": {nt: {"w": nrm((hidden, hidden)),
                         "b": jnp.zeros((hidden,), jnp.float32)}
                    for nt in node_types},
            "skip": {nt: nrm((1,), scale=1.0) for nt in node_types},
            "a_rel": {et: nrm((heads, d, d)) for et in edge_types},      # K relation
            "m_rel": {et: nrm((heads, d, d)) for et in edge_types},      # V relation
            "p_rel": {et: 1.0 + nrm((heads,), scale=0.1) for et in edge_types},
        }
        params["convs"].append(layer)
    params["out_lin"] = {"w": nrm((hidden, out_channels)), "b": nrm((out_channels,))}
    return params


def prepare_plan(params, x_dict, masks, node_types, edge_types, *,
                 hidden, heads, target):
    """One-time packing of parameters / masks into the stacked layouts the Pallas kernels
    consume.  All block-diag relation composition and weight folding happens HERE (once),
    not inside the per-forward layer loop."""
    assert hidden % heads == 0
    d = hidden // heads
    t_idx = {nt: i for i, nt in enumerate(node_types)}
    T = len(node_types)
    counts = {nt: x_dict[nt].shape[0] for nt in node_types}
    n_pad = -(-max(counts.values()) // 8) * 8
    f_pad = -(-max(x.shape[1] for x in x_dict.values()) // 8) * 8

    def pad2(a, rows, cols):
        return jnp.pad(a, ((0, rows - a.shape[0]), (0, cols - a.shape[1])))

    x_st = jnp.stack([pad2(x_dict[nt], n_pad, f_pad) for nt in node_types])
    w_in = jnp.stack([pad2(params["lin_in"][nt]["w"], f_pad, hidden)
                      for nt in node_types])
    b_in = jnp.stack([params["lin_in"][nt]["b"].reshape(1, -1) for nt in node_types])

    rel_by_dst = {nt: [et for et in edge_types if et[2] == nt] for nt in node_types}
    n_rel = max(1, max(len(v) for v in rel_by_dst.values()))

    # SMEM meta table: [is_dst, src_type per rel slot]; additive mask bias (f32).
    meta_np = np.zeros((T, 1 + n_rel), np.int32)
    bias_np = np.full((T, n_rel, n_pad, n_pad), -1e30, np.float32)
    for i, nt in enumerate(node_types):
        rels = rel_by_dst[nt]
        meta_np[i, 0] = 1 if rels else 0
        for r, et in enumerate(rels):
            meta_np[i, 1 + r] = t_idx[et[0]]
            m = np.asarray(masks[et], np.float32)
            bias_np[i, r, :m.shape[0], :m.shape[1]] = (m - 1.0) * np.float32(1e30)
    meta = jnp.asarray(meta_np)
    bias = jnp.asarray(bias_np)

    def block_diag_heads(m):                                    # (H, d, d) -> (H*d, H*d)
        return jax.scipy.linalg.block_diag(*[m[h] for h in range(heads)])

    layers = []
    for layer in params["convs"]:
        qw, qb, ow, ob, alpha = [], [], [], [], []
        kw, kb, vw, vb = [], [], [], []
        for nt in node_types:
            w_kqv = layer["kqv"][nt]["w"]
            b_kqv = layer["kqv"][nt]["b"]
            qw.append(w_kqv[:, hidden:2 * hidden])
            qb.append(b_kqv[hidden:2 * hidden].reshape(1, -1))
            ow.append(layer["out"][nt]["w"])
            ob.append(layer["out"][nt]["b"].reshape(1, -1))
            alpha.append(jax.nn.sigmoid(layer["skip"][nt]).reshape(1))
            kws, kbs, vws, vbs = [], [], [], []
            rels = rel_by_dst[nt]
            for r in range(n_rel):
                if r < len(rels):
                    et = rels[r]
                    st = et[0]
                    scale = (layer["p_rel"][et]
                             / jnp.sqrt(jnp.float32(d)))[:, None, None]
                    a_bd = block_diag_heads(layer["a_rel"][et] * scale)
                    m_bd = block_diag_heads(layer["m_rel"][et])
                    w_src = layer["kqv"][st]["w"]
                    b_src = layer["kqv"][st]["b"]
                    # fold relation transform into the source K/V projection weights
                    kws.append(w_src[:, :hidden] @ a_bd)
                    kbs.append((b_src[:hidden] @ a_bd).reshape(1, -1))
                    vws.append(w_src[:, 2 * hidden:] @ m_bd)
                    vbs.append((b_src[2 * hidden:] @ m_bd).reshape(1, -1))
                else:                                           # padded relation slot
                    kws.append(jnp.zeros((hidden, hidden), jnp.float32))
                    kbs.append(jnp.zeros((1, hidden), jnp.float32))
                    vws.append(jnp.zeros((hidden, hidden), jnp.float32))
                    vbs.append(jnp.zeros((1, hidden), jnp.float32))
            kw.append(jnp.stack(kws)); kb.append(jnp.stack(kbs))
            vw.append(jnp.stack(vws)); vb.append(jnp.stack(vbs))
        layers.append({
            "qw": jnp.stack(qw), "qb": jnp.stack(qb),
            "ow": jnp.stack(ow), "ob": jnp.stack(ob),
            "alpha": jnp.stack(alpha),                          # (T, 1) SMEM gate
            "kw": jnp.stack(kw), "kb": jnp.stack(kb),
            "vw": jnp.stack(vw), "vb": jnp.stack(vb),
        })

    return {
        "x_st": x_st, "w_in": w_in, "b_in": b_in,
        "meta": meta, "bias": bias, "layers": layers,
        "out_w": params["out_lin"]["w"], "out_b": params["out_lin"]["b"],
        "t_target": t_idx[target], "n_target": counts[target],
        "hidden": hidden, "heads": heads, "n_rel": n_rel,
    }


def hgt_forward(plan):
    """Pallas-kernel forward: 1 input-projection call + 1 fused call per HGTConv layer
    + 1 classifier call.  Dropout is identity (eval mode)."""
    h_st = stacked_linear(plan["x_st"], plan["w_in"], plan["b_in"],
                          activation="relu")                    # (T, n_pad, hidden)
    for pack in plan["layers"]:
        h_st = hgt_layer_apply(h_st, pack, plan["meta"], plan["bias"],
                               hidden=plan["hidden"], heads=plan["heads"],
                               n_rel=plan["n_rel"])
        # dropout on the target node type: identity (eval mode)
    out = pallas_out_linear(h_st, plan["out_w"], plan["out_b"], plan["t_target"])
    return out[: plan["n_target"]]


# ----------------------------------------------------------------------------
# Pure-JAX reference (same math) for a correctness check
# ----------------------------------------------------------------------------

def hgt_reference(params, x_dict, masks, edge_types, *, hidden, heads, target):
    d = hidden // heads

    def lin(x, p, act=False):
        y = x @ p["w"] + p["b"]
        return jnp.maximum(y, 0.0) if act else y

    h = {nt: lin(x, params["lin_in"][nt], True) for nt, x in x_dict.items()}
    dst_types = sorted({et[2] for et in edge_types})
    for layer in params["convs"]:
        kd, qd, vd = {}, {}, {}
        for nt, hx in h.items():
            kqv = lin(hx, layer["kqv"][nt])
            kd[nt] = kqv[:, :hidden]
            qd[nt] = kqv[:, hidden:2 * hidden]
            vd[nt] = kqv[:, 2 * hidden:]
        new_h = {}
        for dt in dst_types:
            rel = [et for et in edge_types if et[2] == dt]
            kb, vb, mb = [], [], []
            for et in rel:
                st = et[0]
                a = layer["a_rel"][et] * (
                    layer["p_rel"][et] / jnp.sqrt(jnp.float32(d)))[:, None, None]
                ksrc = kd[st].reshape(-1, heads, d)
                vsrc = vd[st].reshape(-1, heads, d)
                kb.append(jnp.einsum("nhd,hde->nhe", ksrc, a).reshape(-1, hidden))
                vb.append(jnp.einsum("nhd,hde->nhe", vsrc,
                                     layer["m_rel"][et]).reshape(-1, hidden))
                mb.append(masks[et])
            K = jnp.concatenate(kb, 0).reshape(-1, heads, d)
            V = jnp.concatenate(vb, 0).reshape(-1, heads, d)
            M = jnp.concatenate(mb, 1)
            Q = qd[dt].reshape(-1, heads, d)
            s = jnp.einsum("nhd,mhd->nhm", Q, K)
            s = jnp.where(M[:, None, :] > 0, s, -1e30)
            smax = jnp.max(s, -1, keepdims=True)
            smax = jnp.where(smax < -1e29, 0.0, smax)
            p = jnp.exp(s - smax) * M[:, None, :]
            den = jnp.sum(p, -1, keepdims=True)
            alpha = p / jnp.where(den > 0, den, 1.0)
            msg = jnp.einsum("nhm,mhd->nhd", alpha, V).reshape(-1, hidden)
            g = jax.nn.gelu(msg, approximate=False)
            a_out = g @ layer["out"][dt]["w"] + layer["out"][dt]["b"]
            sk = jax.nn.sigmoid(layer["skip"][dt])
            new_h[dt] = sk * a_out + (1.0 - sk) * h[dt]
        for nt in h:
            if nt not in new_h:
                new_h[nt] = h[nt]
        h = new_h
    return lin(h[target], params["out_lin"])


# ----------------------------------------------------------------------------
# Driver
# ----------------------------------------------------------------------------

if __name__ == "__main__":
    hidden, heads, out_channels, num_layers = 32, 2, 4, 2
    target = "paper"
    node_types = ["author", "paper", "venue"]
    feat_dims = {"author": 12, "paper": 20, "venue": 6}
    num_nodes = {"author": 16, "paper": 24, "venue": 8}
    edge_types = [("author", "writes", "paper"),
                  ("paper", "rev_writes", "author"),
                  ("paper", "published_in", "venue"),
                  ("venue", "rev_published_in", "paper")]

    key = jax.random.PRNGKey(0)
    k_feat = jax.random.split(key, len(node_types) + 1)
    x_dict = {
        nt: jax.random.normal(k_feat[i], (num_nodes[nt], feat_dims[nt]),
                              dtype=jnp.float32)
        for i, nt in enumerate(node_types)
    }

    # deterministic synthetic edge_index_dict -> dense adjacency masks (unique pairs;
    # de-duplication is a precondition for the dense-mask softmax to match PyG exactly)
    edge_index_dict, masks = {}, {}
    for seed, et in enumerate(edge_types):
        st, _, dt = et
        rng = np.random.default_rng(1234 + seed)
        src = rng.integers(0, num_nodes[st], size=48)
        dst = rng.integers(0, num_nodes[dt], size=48)
        pairs = np.unique(np.stack([src, dst], axis=1), axis=0)
        edge_index_dict[et] = jnp.asarray(pairs.T, dtype=jnp.int32)   # (2, E)
        m = np.zeros((num_nodes[dt], num_nodes[st]), np.float32)
        m[pairs[:, 1], pairs[:, 0]] = 1.0
        masks[et] = jnp.asarray(m)

    params = init_params(k_feat[-1], node_types, feat_dims, edge_types,
                         hidden, heads, out_channels, num_layers)

    # one-time packing (block-diag relation composition, weight folding, mask bias)
    plan = prepare_plan(params, dict(x_dict), masks, node_types, edge_types,
                        hidden=hidden, heads=heads, target=target)

    out = hgt_forward(plan)
    out = jax.block_until_ready(out)

    ref = hgt_reference(params, dict(x_dict), masks, edge_types,
                        hidden=hidden, heads=heads, target=target)
    np.testing.assert_allclose(np.asarray(out), np.asarray(ref),
                               rtol=2e-2, atol=2e-3)
    print("KERNEL_OK")
</pallas_src>

<mosaic_0001>
module attributes {stable_mosaic.version = 11 : i64} {
  func.func @_stacked_linear_kernel(%arg0: i32, %arg1: memref<1x24x24xf32, #tpu.memory_space<vmem>>, %arg2: memref<1x24x32xf32, #tpu.memory_space<vmem>>, %arg3: memref<1x1x32xf32, #tpu.memory_space<vmem>>, %arg4: memref<1x24x32xf32, #tpu.memory_space<vmem>>) attributes {dimension_semantics = [#tpu.dimension_semantics<parallel>], iteration_bounds = array<i64: 3>, scalar_prefetch = 0 : i64, scratch_operands = 0 : i64, tpu.core_type = #tpu.core_type<tc>, window_params = [{transform_indices = @transform_0, window_bounds = array<i64: 1, 24, 24>}, {transform_indices = @transform_1, window_bounds = array<i64: 1, 24, 32>}, {transform_indices = @transform_2, window_bounds = array<i64: 1, 1, 32>}, {transform_indices = @transform_3, window_bounds = array<i64: 1, 24, 32>}]} {
    %c0 = arith.constant 0 : index
    %c0_0 = arith.constant 0 : index
    %c0_1 = arith.constant 0 : index
    %0 = vector.load %arg1[%c0, %c0_0, %c0_1] : memref<1x24x24xf32, #tpu.memory_space<vmem>>, vector<1x24x24xf32>
    %1 = vector.shape_cast %0 : vector<1x24x24xf32> to vector<24x24xf32>
    %c0_2 = arith.constant 0 : index
    %c0_3 = arith.constant 0 : index
    %c0_4 = arith.constant 0 : index
    %2 = vector.load %arg2[%c0_2, %c0_3, %c0_4] : memref<1x24x32xf32, #tpu.memory_space<vmem>>, vector<1x24x32xf32>
    %3 = vector.shape_cast %2 : vector<1x24x32xf32> to vector<24x32xf32>
    %cst = arith.constant dense<0.000000e+00> : vector<24x32xf32>
    %4 = tpu.matmul %1, %3, %cst {dimension_numbers = #tpu.dot_dimension_numbers<[1], [0], [0], [1], [0, 0, 1, 1], [], []>} : vector<24x24xf32>, vector<24x32xf32>, vector<24x32xf32> -> vector<24x32xf32>
    %c0_5 = arith.constant 0 : index
    %c0_6 = arith.constant 0 : index
    %c0_7 = arith.constant 0 : index
    %5 = vector.load %arg3[%c0_5, %c0_6, %c0_7] : memref<1x1x32xf32, #tpu.memory_space<vmem>>, vector<1x1x32xf32>
    %6 = vector.shape_cast %5 : vector<1x1x32xf32> to vector<1x32xf32>
    %7 = vector.broadcast %6 : vector<1x32xf32> to vector<24x32xf32>
    %8 = arith.addf %4, %7 : vector<24x32xf32>
    %cst_8 = arith.constant 0.000000e+00 : f32
    %9 = vector.broadcast %cst_8 : f32 to vector<24x32xf32>
    %10 = arith.maximumf %8, %9 : vector<24x32xf32>
    %c0_9 = arith.constant 0 : index
    %c0_10 = arith.constant 0 : index
    %c0_11 = arith.constant 0 : index
    %11 = vector.load %arg4[%c0_9, %c0_10, %c0_11] : memref<1x24x32xf32, #tpu.memory_space<vmem>>, vector<1x24x32xf32>
    %12 = vector.shape_cast %11 : vector<1x24x32xf32> to vector<24x32xf32>
    %13 = vector.shape_cast %10 : vector<24x32xf32> to vector<1x24x32xf32>
    tpu.vector_store %arg4[%c0_9, %c0_10, %c0_11], %13 {strides = array<i32>} : memref<1x24x32xf32, #tpu.memory_space<vmem>>, vector<1x24x32xf32>,
    return
  }
  func.func @transform_0(%arg0: i32) -> (i32, i32, i32) {
    %c0_i32 = arith.constant 0 : i32
    %c0_i32_0 = arith.constant 0 : i32
    %c0_i32_1 = arith.constant 0 : i32
    return %arg0, %c0_i32, %c0_i32_0 : i32, i32, i32
  }
  func.func @transform_1(%arg0: i32) -> (i32, i32, i32) {
    %c0_i32 = arith.constant 0 : i32
    %c0_i32_0 = arith.constant 0 : i32
    %c0_i32_1 = arith.constant 0 : i32
    return %arg0, %c0_i32, %c0_i32_0 : i32, i32, i32
  }
  func.func @transform_2(%arg0: i32) -> (i32, i32, i32) {
    %c0_i32 = arith.constant 0 : i32
    %c0_i32_0 = arith.constant 0 : i32
    %c0_i32_1 = arith.constant 0 : i32
    return %arg0, %c0_i32, %c0_i32_0 : i32, i32, i32
  }
  func.func @transform_3(%arg0: i32) -> (i32, i32, i32) {
    %c0_i32 = arith.constant 0 : i32
    %c0_i32_0 = arith.constant 0 : i32
    %c0_i32_1 = arith.constant 0 : i32
    return %arg0, %c0_i32, %c0_i32_0 : i32, i32, i32
  }
}

</mosaic_0001>

<llo_original>
// kernel: tpu_custom_call.1
$region0: #{tpu_custom_call.1}
  #allocation0 [shape = 'u32[]', space=smem, size = 0x4, offset = 0x4, fixed_abs, tag = 'smem constant byte address 0x4 - core index']
  #allocation1 [shape = 'u32[144,128]{1,0:T(1,128)}', space=vmem, size = 0x12000, scoped, tag = 'internal scratch']
  %s0 = inlined_call_operand.hbm [shape: f32[3,24,24], index: 0, kind: input, shape index: {}]
  %s1 = inlined_call_operand.hbm [shape: f32[3,24,32], index: 1, kind: input, shape index: {}]
  %s2 = inlined_call_operand.vmem [shape: f32[3,1,32], index: 2, kind: input, shape index: {}]
  %s3 = inlined_call_operand.hbm [shape: f32[3,24,32], index: 3, kind: output, shape index: {}]
  %s4 = sld [smem:[#allocation0]]
  $region53: #{tpu_custom_call.1} parent=0
    _
  %s6 = ssub.s32 1, %s4
  %s7 = scalar_select 0, %s6, %s4
  $region1: #{tpu_custom_call.1} parent=0
    #allocation2 [shape = 'u8[24576]{0}', space=vmem, size = 0x6000, scoped, tag = 'input window, operand 0']
    #allocation3 [shape = 's32[2]{0}', space=sflag, size = 0x8, scoped, tag = 'scoped memory for tpu_custom_call.1']
    #allocation4 [shape = 's32[2]{0}', space=sflag, size = 0x8, scoped, tag = 'scoped memory for tpu_custom_call.1']
    #allocation5 [shape = 'u8[24576]{0}', space=vmem, size = 0x6000, scoped, tag = 'input window, operand 1']
    #allocation6 [shape = 's32[2]{0}', space=sflag, size = 0x8, scoped, tag = 'scoped memory for tpu_custom_call.1']
    #allocation7 [shape = 'u8[24576]{0}', space=vmem, size = 0x6000, scoped, tag = 'output window, operand 0']
    %8 = vsyncpa [#allocation3], 0
    %s9 = scalar_lea.sflag [#allocation3], 1
    %10 = vsyncpa %s9, 0
    %11 = vsyncpa [#allocation6], 0
    %s12 = scalar_lea.sflag [#allocation6], 1
    %13 = vsyncpa %s12, 0
    %14 = vsyncpa [#allocation4], 0
    %s15 = scalar_lea.sflag [#allocation4], 1
    %16 = vsyncpa %s15, 0
    loop: start=0, step=1, limit=5
    $region2: #{tpu_custom_call.1} parent=1 // loop_pre_header
      _
    $region3: #{tpu_custom_call.1} parent=1 // loop_header
      %s18 = sphi 0, %s22
      %p19 = scmp.ge.s32.totalorder %s18, 5
      %s28 = sphi 0, %s30
      %s31 = sphi 0, %s28
      %s32 = sphi 0, %s31
      %s48 = sphi 0, %s32
      %s54 = sphi 0, %s56
      %s57 = sphi 0, %s54
      %s58 = sphi 0, %s57
      %s74 = sphi 0, %s58
      %s80 = sphi 0, %s82
      %s83 = sphi 0, %s80
      %s84 = sphi 0, %s83
      %s100 = sphi 0, %s84
      %s106 = sphi 0, %s108
      %s109 = sphi 0, %s106
      %s110 = sphi 0, %s109
      %s126 = sphi 0, %s110
    $region4: #{tpu_custom_call.1} parent=1 // loop_header_branch
      %21 = sbr.rel (%p19) target = $region8
    $region5: #{tpu_custom_call.1} parent=1 // loop_body
      %s23 = ssub.s32 %s18, 1
      %s24 = ssub.s32 %s18, 2
      %s25 = sadd.s32 %s18, 1
      %s26 = ssub.s32 %s18, %s25
      %p27 = scmp.eq.s32.totalorder %s26, 0
      %s29 = sadd.s32 %s28, 1
      %s30 = scalar_select %p27, %s28, %s29
      %p33 = pneg %p27
      %p34 = scmp.eq.s32.totalorder %s18, 2
      %p35 = por %p33, %p34
      %p36 = scmp.ne.s32.totalorder %s28, %s31
      %p37 = scmp.eq.s32.totalorder %s18, 0
      %p38 = por %p36, %p37
      %p39 = scmp.ne.s32.totalorder %s28, %s31
      %p40 = scmp.eq.s32.totalorder %s23, 2
      %p41 = por %p39, %p40
      %p42 = scmp.ne.s32.totalorder %s31, %s32
      %p43 = scmp.eq.s32.totalorder %s23, 0
      %p44 = por %p42, %p43
      %p45 = scmp.ne.s32.totalorder %s31, %s32
      %p46 = scmp.eq.s32.totalorder %s24, 2
      %p47 = por %p45, %p46
      %p49 = scmp.ne.s32.totalorder %s32, %s48
      %p50 = scmp.eq.s32.totalorder %s24, 0
      %p51 = por %p49, %p50
      %s52 = ssub.s32 %s18, %s25
      %p53 = scmp.eq.s32.totalorder %s52, 0
      %s55 = sadd.s32 %s54, 1
      %s56 = scalar_select %p53, %s54, %s55
      %p59 = pneg %p53
      %p60 = scmp.eq.s32.totalorder %s18, 2
      %p61 = por %p59, %p60
      %p62 = scmp.ne.s32.totalorder %s54, %s57
      %p63 = scmp.eq.s32.totalorder %s18, 0
      %p64 = por %p62, %p63
      %p65 = scmp.ne.s32.totalorder %s54, %s57
      %p66 = scmp.eq.s32.totalorder %s23, 2
      %p67 = por %p65, %p66
      %p68 = scmp.ne.s32.totalorder %s57, %s58
      %p69 = scmp.eq.s32.totalorder %s23, 0
      %p70 = por %p68, %p69
      %p71 = scmp.ne.s32.totalorder %s57, %s58
      %p72 = scmp.eq.s32.totalorder %s24, 2
      %p73 = por %p71, %p72
      %p75 = scmp.ne.s32.totalorder %s58, %s74
      %p76 = scmp.eq.s32.totalorder %s24, 0
      %p77 = por %p75, %p76
      %s78 = ssub.s32 %s18, %s25
      %p79 = scmp.eq.s32.totalorder %s78, 0
      %s81 = sadd.s32 %s80, 1
      %s82 = scalar_select %p79, %s80, %s81
      %p85 = pneg %p79
      %p86 = scmp.eq.s32.totalorder %s18, 2
      %p87 = por %p85, %p86
      %p88 = scmp.ne.s32.totalorder %s80, %s83
      %p89 = scmp.eq.s32.totalorder %s18, 0
      %p90 = por %p88, %p89
      %p91 = scmp.ne.s32.totalorder %s80, %s83
      %p92 = scmp.eq.s32.totalorder %s23, 2
      %p93 = por %p91, %p92
      %p94 = scmp.ne.s32.totalorder %s83, %s84
      %p95 = scmp.eq.s32.totalorder %s23, 0
      %p96 = por %p94, %p95
      %p97 = scmp.ne.s32.totalorder %s83, %s84
      %p98 = scmp.eq.s32.totalorder %s24, 2
      %p99 = por %p97, %p98
      %p101 = scmp.ne.s32.totalorder %s84, %s100
      %p102 = scmp.eq.s32.totalorder %s24, 0
      %p103 = por %p101, %p102
      %s104 = ssub.s32 %s18, %s25
      %p105 = scmp.eq.s32.totalorder %s104, 0
      %s107 = sadd.s32 %s106, 1
      %s108 = scalar_select %p105, %s106, %s107
      %p111 = pneg %p105
      %p112 = scmp.eq.s32.totalorder %s18, 2
      %p113 = por %p111, %p112
      %p114 = scmp.ne.s32.totalorder %s106, %s109
      %p115 = scmp.eq.s32.totalorder %s18, 0
      %p116 = por %p114, %p115
      %p117 = scmp.ne.s32.totalorder %s106, %s109
      %p118 = scmp.eq.s32.totalorder %s23, 2
      %p119 = por %p117, %p118
      %p120 = scmp.ne.s32.totalorder %s109, %s110
      %p121 = scmp.eq.s32.totalorder %s23, 0
      %p122 = por %p120, %p121
      %p123 = scmp.ne.s32.totalorder %s109, %s110
      %p124 = scmp.eq.s32.totalorder %s24, 2
      %p125 = por %p123, %p124
      %p127 = scmp.ne.s32.totalorder %s110, %s126
      %p128 = scmp.eq.s32.totalorder %s24, 0
      %p129 = por %p127, %p128
      %p130 = scmp.le.s32.totalorder 1, %s18
      %p131 = scmp.lt.s32.totalorder %s18, 4
      %p132 = pnand %p130, %p131
      %p133 = pneg %p132
      // Predicated region
      $region9: #{tpu_custom_call.1} parent=5 // pred_check
        _
      $region10: #{tpu_custom_call.1} parent=5 // pred_check_branch
        %135 = sbr.rel (%p132) target = $region12
      $region11: #{tpu_custom_call.1} parent=5 // pred_region
        %s136 = ssub.s32 %s18, 1
      $region12: #{tpu_custom_call.1} parent=5 // pred_fallthru
        _
      %p137 = scmp.lt.s32.totalorder %s18, 3
      // Predicated region
      $region13: #{tpu_custom_call.1} parent=5 // pred_check
        %p138 = pneg %p137
      $region14: #{tpu_custom_call.1} parent=5 // pred_check_branch
        %140 = sbr.rel (%p138) target = $region16
      $region15: #{tpu_custom_call.1} parent=5 // pred_region
        // Predicated region
        $region17: #{tpu_custom_call.1} parent=15 // pred_check
          %p141 = pneg %p38
        $region18: #{tpu_custom_call.1} parent=15 // pred_check_branch
          %143 = sbr.rel (%p141) target = $region20
        $region19: #{tpu_custom_call.1} parent=15 // pred_region
          %s144 = sand.u32 %s28, 1
          %s145 = scalar_lea.sflag [#allocation3], %s144
          %s146 = sand.u32 %s28, 1
          %s147 = smul.addr %s146, 24
          %s148 = scalar_lea.vmem [#allocation2], %s147
          %s150 = ssub.s32 384, 384
          %151 = vsyncadd %s145, %s150
          %s152 = smul.addr %s18, 3
          %s153 = smul.addr %s152, 128
          %s154 = scalar_lea.hbm %s0, %s153
          %s155 = sshll.u32 %s148, 4
          %s156 = int_to_ptr.vmem [resolvable:$true] %s155
          %161 = dma.hbm_to_vmem [thread:$0]  %s154, 384, %s156, %s145, 128, 128, 8
        $region20: #{tpu_custom_call.1} parent=15 // pred_fallthru
          _
        // Predicated region
        $region21: #{tpu_custom_call.1} parent=15 // pred_check
          %p162 = pneg %p64
        $region22: #{tpu_custom_call.1} parent=15 // pred_check_branch
          %164 = sbr.rel (%p162) target = $region24
        $region23: #{tpu_custom_call.1} parent=15 // pred_region
          %s165 = sand.u32 %s54, 1
          %s166 = scalar_lea.sflag [#allocation6], %s165
          %s167 = sand.u32 %s54, 1
          %s168 = smul.addr %s167, 24
          %s169 = scalar_lea.vmem [#allocation5], %s168
          %s171 = ssub.s32 384, 384
          %172 = vsyncadd %s166, %s171
          %s173 = smul.addr %s18, 3
          %s174 = smul.addr %s173, 128
          %s175 = scalar_lea.hbm %s1, %s174
          %s176 = sshll.u32 %s169, 4
          %s177 = int_to_ptr.vmem [resolvable:$true] %s176
          %182 = dma.hbm_to_vmem [thread:$0]  %s175, 384, %s177, %s166, 128, 128, 8
        $region24: #{tpu_custom_call.1} parent=15 // pred_fallthru
          _
        // Predicated region
        $region25: #{tpu_custom_call.1} parent=15 // pred_check
          %p183 = pneg %p90
        $region26: #{tpu_custom_call.1} parent=15 // pred_check_branch
          %185 = sbr.rel (%p183) target = $region28
        $region27: #{tpu_custom_call.1} parent=15 // pred_region
          %p186 = scmp.lt.s32.totalorder %s18, 2
          %s187 = scalar_select %p186, %s18, 2
          %s188 = scalar_lea.vmem %s2, %s187
        $region28: #{tpu_custom_call.1} parent=15 // pred_fallthru
          _
      $region16: #{tpu_custom_call.1} parent=5 // pred_fallthru
        _
      %p189 = scmp.le.s32.totalorder 1, %s18
      %p190 = scmp.lt.s32.totalorder %s18, 4
      %p191 = pnand %p189, %p190
      %p192 = pneg %p191
      // Predicated region
      $region29: #{tpu_custom_call.1} parent=5 // pred_check
        _
      $region30: #{tpu_custom_call.1} parent=5 // pred_check_branch
        %194 = sbr.rel (%p191) target = $region32
      $region31: #{tpu_custom_call.1} parent=5 // pred_region
        %s195 = ssub.s32 %s18, 1
        %s196 = sand.u32 %s31, 1
        %s197 = scalar_lea.sflag [#allocation3], %s196
        %s198 = sand.u32 %s31, 1
        %s199 = smul.addr %s198, 24
        %s200 = scalar_lea.vmem [#allocation2], %s199
        // Predicated region
        $region33: #{tpu_custom_call.1} parent=31 // pred_check
          %p201 = pneg %p44
        $region34: #{tpu_custom_call.1} parent=31 // pred_check_branch
          %203 = sbr.rel (%p201) target = $region36
        $region35: #{tpu_custom_call.1} parent=31 // pred_region
          %204 = dma.done %s197, 384
        $region36: #{tpu_custom_call.1} parent=31 // pred_fallthru
          _
        %s205 = sand.u32 %s57, 1
        %s206 = scalar_lea.sflag [#allocation6], %s205
        %s207 = sand.u32 %s57, 1
        %s208 = smul.addr %s207, 24
        %s209 = scalar_lea.vmem [#allocation5], %s208
        // Predicated region
        $region37: #{tpu_custom_call.1} parent=31 // pred_check
          %p210 = pneg %p70
        $region38: #{tpu_custom_call.1} parent=31 // pred_check_branch
          %212 = sbr.rel (%p210) target = $region40
        $region39: #{tpu_custom_call.1} parent=31 // pred_region
          %213 = dma.done %s206, 384
        $region40: #{tpu_custom_call.1} parent=31 // pred_fallthru
          _
        %s214 = sand.u32 %s31, 1
        %s215 = scalar_lea.sflag [#allocation3], %s214
        %s216 = sand.u32 %s31, 1
        %s217 = smul.addr %s216, 24
        %s218 = scalar_lea.vmem [#allocation2], %s217
        %p219 = pneg %p44
        %p220 = pneg %p41
        %s221 = sand.u32 %s57, 1
        %s222 = scalar_lea.sflag [#allocation6], %s221
        %s223 = sand.u32 %s57, 1
        %s224 = smul.addr %s223, 24
        %s225 = scalar_lea.vmem [#allocation5], %s224
        %p226 = pneg %p70
        %p227 = pneg %p67
        %p228 = scmp.lt.s32.totalorder %s23, 2
        %s229 = scalar_select %p228, %s23, 2
        %s230 = scalar_lea.vmem %s2, %s229
        %p231 = pneg %p96
        %p232 = pneg %p93
        %p233 = pneg %p122
        %p234 = pneg %p119
        %s235 = sand.u32 %s109, 1
        %s236 = scalar_lea.sflag [#allocation4], %s235
        %s237 = sand.u32 %s109, 1
        %s238 = smul.addr %s237, 24
        %s239 = scalar_lea.vmem [#allocation7], %s238
        %p240 = scmp.lt.s32.totalorder %s23, 2
        %s241 = scalar_select %p240, %s23, 2
        %s242 = scalar_lea.vmem %s2, %s241
        %v243 = vld [vmem:[%s200] sm:$0xff]
        %v244 = vld [vmem:[%s200 + $0x8] sm:$0xff]
        %v245 = vld [vmem:[%s200 + $0x10] sm:$0xff]
        %v246 = vld [vmem:[%s209] sm:$0xff]
        %v247 = vld [vmem:[%s209 + $0x8] sm:$0xff]
        %v248 = vld [vmem:[%s209 + $0x10] sm:$0xff]
        %v249 = vld [vmem:[%s242] sm:$0x1]
        %v251 = vlaneseq
        %v252 = vshrl.u32 %v251, 7
        %v253 = vsub.s32 0, %v252
        %v254 = vrot.slane %v249, %v253
        %vm256 = vcmask 195584
        %v258 = vsel %vm256, %v243, 0
        %v261 = vsel %vm256, %v244, 0
        %v264 = vsel %vm256, %v245, 0
        %266 = vmatprep.subr.mxu0 0.0
        %267 = vmatpush1.msra.mxu0 %v246
        %268 = vmatprep.subr.mxu0 0.0
        %269 = vmatpush1.msra.mxu0 %v247
        %270 = vmatprep.subr.mxu0 0.0
        %271 = vmatpush1.msra.mxu0 %v248
        %272 = vmatprep.subr.mxu0 0.0
        %273 = vmatpush1.msra.mxu0 0.0
        %274 = vmatprep.subr.mxu0 0.0
        %275 = vmatpush1.msra.mxu0 0.0
        %276 = vmatprep.subr.mxu0 0.0
        %277 = vmatpush1.msra.mxu0 0.0
        %278 = vmatprep.subr.mxu0 0.0
        %279 = vmatpush1.msra.mxu0 0.0
        %280 = vmatprep.subr.mxu0 0.0
        %281 = vmatpush1.msra.mxu0 0.0
        %282 = vmatprep.subr.mxu0 0.0
        %283 = vmatpush1.msra.mxu0 0.0
        %284 = vmatprep.subr.mxu0 0.0
        %285 = vmatpush1.msra.mxu0 0.0
        %286 = vmatprep.subr.mxu0 0.0
        %287 = vmatpush1.msra.mxu0 0.0
        %288 = vmatprep.subr.mxu0 0.0
        %289 = vmatpush1.msra.mxu0 0.0
        %290 = vmatprep.subr.mxu0 0.0
        %291 = vmatpush1.msra.mxu0 0.0
        %292 = vmatprep.subr.mxu0 0.0
        %293 = vmatpush1.msra.mxu0 0.0
        %294 = vmatprep.subr.mxu0 0.0
        %295 = vmatpush1.msra.mxu0 0.0
        %296 = vmatprep.subr.mxu0 0.0
        %297 = vmatpush1.msra.mxu0 0.0
        %298 = vmatprep.subr.mxu0 0.0
        %299 = vmatpush1.msra.mxu0 0.0
        %300 = vmatprep.subr.mxu0 0.0
        %301 = vmatpush1.msra.mxu0 0.0
        %302 = vmatprep.subr.mxu0 0.0
        %303 = vmatpush1.msra.mxu0 0.0
        %304 = vmatprep.subr.mxu0 0.0
        %305 = vmatpush1.msra.mxu0 0.0
        %306 = vmatprep.subr.mxu0 0.0
        %307 = vmatpush1.msra.mxu0 0.0
        %308 = vmatprep.subr.mxu0 0.0
        %309 = vmatpush1.msra.mxu0 0.0
        %310 = vmatprep.subr.mxu0 0.0
        %311 = vmatpush1.msra.mxu0 0.0
        %312 = vmatprep.subr.mxu0 0.0
        %313 = vmatpush1.msra.mxu0 0.0
        %314 = vmatprep.subr.mxu0 0.0
        %315 = vmatpush1.msra.mxu0 0.0
        %316 = vmatprep.subr.mxu0 0.0
        %317 = vmatpush1.msra.mxu0 0.0
        %318 = vmatprep.subr.mxu0 0.0
        %319 = vmatpush1.msra.mxu0 0.0
        %320 = vmatprep.subr.mxu0 0.0
        %321 = vmatpush1.msra.mxu0 0.0
        %322 = vmatprep.subr.mxu0 0.0
        %323 = vmatpush1.msra.mxu0 0.0
        %324 = vmatprep.subr.mxu0 0.0
        %325 = vmatpush1.msra.mxu0 0.0
        %326 = vmatprep.subr.mxu0 0.0
        %327 = vmatpush1.msra.mxu0 0.0
        %328 = vmatprep.subr.mxu0 0.0
        %329 = vmatpush1.msra.mxu0 0.0
        %330 = vmatprep.mubr.f32.mxu0 0.0
        %331 = vmatmul.mubr.f32.gmra.mrb[0].mxu0 %v258
        %v332 = vpop.f32.mrb[0].mxu0
        %v333 = vadd.f32 %v254, %v332
        %v334 = vpop.f32.mrb[0].mxu0
        %335 = vmatprep.mubr.f32.mxu0 0.0
        %336 = vmatmul.mubr.f32.gmra.mrb[0].mxu0 %v261
        %v337 = vpop.f32.mrb[0].mxu0
        %v338 = vadd.f32 %v254, %v337
        %v339 = vpop.f32.mrb[0].mxu0
        %340 = vmatprep.mubr.f32.mxu0 0.0
        %341 = vmatmul.mubr.f32.gmra.mrb[0].mxu0 %v264
        %v342 = vpop.f32.mrb[0].mxu0
        %v343 = vadd.f32 %v254, %v342
        %v344 = vpop.f32.mrb[0].mxu0
        %345 = vdwg.mxu0
        %v346 = vmax.f32 %v333, 0.0
        %v347 = vmax.f32 %v338, 0.0
        %v348 = vmax.f32 %v343, 0.0
        %vm349 = vcmask 261120
        %350 = vst.msk [vmem:[%s239] sm:$0xff] %vm349, %v346
        %351 = vst.msk [vmem:[%s239 + $0x8] sm:$0xff] %vm349, %v347
        %352 = vst.msk [vmem:[%s239 + $0x10] sm:$0xff] %vm349, %v348
        %s353 = sand.u32 %s109, 1
        %s354 = scalar_lea.sflag [#allocation4], %s353
        %s355 = sand.u32 %s109, 1
        %s356 = smul.addr %s355, 24
        %s357 = scalar_lea.vmem [#allocation7], %s356
        // Predicated region
        $region41: #{tpu_custom_call.1} parent=31 // pred_check
          %p358 = pneg %p119
        $region42: #{tpu_custom_call.1} parent=31 // pred_check_branch
          %360 = sbr.rel (%p358) target = $region44
        $region43: #{tpu_custom_call.1} parent=31 // pred_region
          %s362 = ssub.s32 384, 384
          %363 = vsyncadd %s354, %s362
          %s364 = smul.addr %s23, 3
          %s365 = smul.addr %s364, 128
          %s366 = scalar_lea.hbm %s3, %s365
          %s367 = sshll.u32 %s357, 4
          %s368 = int_to_ptr.vmem [resolvable:$true] %s367
          %373 = dma.vmem_to_hbm [thread:$0]  %s368, 384, %s366, %s354, 128, 128, 8
        $region44: #{tpu_custom_call.1} parent=31 // pred_fallthru
          _
      $region32: #{tpu_custom_call.1} parent=5 // pred_fallthru
        _
      %p374 = scmp.le.s32.totalorder 2, %s18
      // Predicated region
      $region45: #{tpu_custom_call.1} parent=5 // pred_check
        %p375 = pneg %p374
      $region46: #{tpu_custom_call.1} parent=5 // pred_check_branch
        %377 = sbr.rel (%p375) target = $region48
      $region47: #{tpu_custom_call.1} parent=5 // pred_region
        %s378 = ssub.s32 %s18, 2
        // Predicated region
        $region49: #{tpu_custom_call.1} parent=47 // pred_check
          %p379 = pneg %p125
        $region50: #{tpu_custom_call.1} parent=47 // pred_check_branch
          %381 = sbr.rel (%p379) target = $region52
        $region51: #{tpu_custom_call.1} parent=47 // pred_region
          %s382 = sand.u32 %s110, 1
          %s383 = scalar_lea.sflag [#allocation4], %s382
          %s384 = sand.u32 %s110, 1
          %s385 = smul.addr %s384, 24
          %s386 = scalar_lea.vmem [#allocation7], %s385
          %387 = dma.done %s383, 384
        $region52: #{tpu_custom_call.1} parent=47 // pred_fallthru
          _
      $region48: #{tpu_custom_call.1} parent=5 // pred_fallthru
        _
    $region6: #{tpu_custom_call.1} parent=1 // loop_footer
      %s22 = sadd.s32 1, %s18
    $region7: #{tpu_custom_call.1} parent=1 // loop_footer_branch
      %17 = sbr.rel target = $region3
    $region8: #{tpu_custom_call.1} parent=1 // loop_exit
      _
    %388 = vsyncpa [#allocation3], 1
    %s389 = scalar_lea.sflag [#allocation3], 1
    %390 = vsyncpa %s389, 1
    %391 = vsyncpa [#allocation6], 1
    %s392 = scalar_lea.sflag [#allocation6], 1
    %393 = vsyncpa %s392, 1
    %394 = vsyncpa [#allocation4], 1
    %s395 = scalar_lea.sflag [#allocation4], 1
    %396 = vsyncpa %s395, 1

</llo_original>
